<compile_context>
chip_gen: v7x
topology: tpu7x:2x2x1
jax: 0.10.0
libtpu: 0.0.40
codegen_flags: <defaults>
</compile_context>

<pallas_src>
import jax
import jax.numpy as jnp
from jax import lax
from jax.experimental import pallas as pl
from jax.experimental.pallas import tpu as pltpu


LANE = 128
SUBLANE = 8


def _round_up(n, m):
    return ((n + m - 1) // m) * m


def _pick_fold(rows, HW):
    # Pack sublanes when B*C is not 8-aligned: view (rows, HW) as
    # (rows*f, HW//f).  Selector / weight rows are built to match the mapping.
    if rows % SUBLANE == 0:
        return 1
    for f in (2, 4, 8):
        if HW % f == 0 and (rows * f) % SUBLANE == 0:
            return f
    return 1


def _pick_b_tile(B, rows_per_image):
    # Smallest batch tile whose row block is 8-sublane aligned (maximizes the
    # number of parallel batch steps); fall back to the full batch (a block
    # equal to the full array dim is always legal).
    for bt in range(1, B + 1):
        if B % bt == 0 and (bt * rows_per_image) % SUBLANE == 0:
            return bt
    return B


def _vmem_capacity_bytes():
    try:
        return int(pltpu.get_tpu_info().vmem_capacity_bytes)
    except Exception:
        return 64 * 1024 * 1024   # conservative fallback (v7x per-core size)


def detector_forward(im, w, b, augment=False, visualize=False, val=False,
                     *, max_hw_tile=32768):
    """im: (B, C, H, W) float.  Returns (B, 5) = [x, y, w, h, _id] per image."""
    B, C, H, W = im.shape
    HW = H * W

    fold = _pick_fold(B * C, HW)
    HW_eff = HW // fold
    rows_per_image = C * fold
    b_tile = _pick_b_tile(B, rows_per_image)
    rows_tile = b_tile * rows_per_image
    n_b = B // b_tile

    # ---- generation-aware tile sizing (streamed blocks are double-buffered) ----
    vmem_cap = _vmem_capacity_bytes()
    budget = min(vmem_cap // 2, 48 * 1024 * 1024)
    max_lanes = max(LANE, (budget // (2 * rows_tile * 4) // LANE) * LANE)
    hw_tile = min(_round_up(HW_eff, LANE), _round_up(max_hw_tile, LANE), max_lanes)
    n_hw = pl.cdiv(HW_eff, hw_tile)

    # When there is only one batch tile, split the spatial reduction across a
    # leading "parallel" axis so a second TensorCore (v7x) gets half the work.
    n_split = 2 if (n_b == 1 and n_hw >= 2) else 1
    steps_per_core = pl.cdiv(n_hw, n_split)
    last_block = n_hw - 1

    n_slices = hw_tile // LANE
    unroll = min(8, n_slices)

    need = (2 * rows_tile * hw_tile + rows_tile * LANE
            + rows_tile * 5 + b_tile * rows_tile) * 4
    vmem_limit = int(min(max(need + 8 * 1024 * 1024, 24 * 1024 * 1024),
                         (vmem_cap * 3) // 4))

    # ---- glue: layout view + tiny constant head params (no hot compute) ----
    x = im.reshape(B * C * fold, HW_eff)                       # pure reshape (view)
    # fold the 1/HW mean scale into the head weight, one row per packed row
    ch = (jnp.arange(rows_tile) // fold) % C
    w_rows = w.astype(jnp.float32)[ch] / float(HW)             # (rows_tile, 5)
    # selector E[lb, r] = 1 iff packed row r belongs to local batch lb
    e = (jnp.arange(rows_tile) // rows_per_image ==
         jnp.arange(b_tile)[:, None]).astype(jnp.float32)      # (b_tile, rows_tile)

    def kernel(x_ref, w_ref, e_ref, o_ref, acc_ref):
        c = pl.program_id(0)
        k = pl.program_id(2)

        @pl.when(k == 0)
        def _init():
            acc_ref[...] = jnp.zeros_like(acc_ref)

        global_step = c * steps_per_core + k
        base = global_step * hw_tile

        def _slice(j):
            start = pl.multiple_of(j * LANE, LANE)
            return x_ref[:, pl.ds(start, LANE)].astype(jnp.float32)

        @pl.when(base + hw_tile <= HW_eff)
        def _full_block():
            # Hot path: 1 vld + 1 vadd per 128-lane slice; carry stays in vregs.
            def body(j, carry):
                return carry + _slice(j)
            local = lax.fori_loop(0, n_slices, body,
                                  jnp.zeros((rows_tile, LANE), jnp.float32),
                                  unroll=unroll)
            acc_ref[...] += local

        @pl.when(base + hw_tile > HW_eff)
        def _tail_block():
            # Ragged tail (or fully out-of-range duplicate split step): mask
            # lanes whose global spatial index is >= HW.  Pallas does not zero
            # out-of-bounds block contents, so the mask is required.
            lane = lax.broadcasted_iota(jnp.int32, (rows_tile, LANE), 1)

            def body(j, carry):
                valid = (base + j * LANE + lane) < HW_eff
                return carry + jnp.where(valid, _slice(j), 0.0)
            local = lax.fori_loop(0, n_slices, body,
                                  jnp.zeros((rows_tile, LANE), jnp.float32),
                                  unroll=unroll)
            acc_ref[...] += local

        @pl.when(k == steps_per_core - 1)
        def _finalize():
            # One cross-lane (XLU) reduce per packed row for the whole reduction.
            pooled = jnp.sum(acc_ref[...], axis=-1, keepdims=True)   # (rows, 1)
            contrib = pooled * w_ref[...]                            # (rows, 5)
            out = jnp.dot(e_ref[...], contrib,
                          preferred_element_type=jnp.float32)        # (b_tile, 5)
            o_ref[...] = out.astype(o_ref.dtype)

    partial = pl.pallas_call(
        kernel,
        out_shape=jax.ShapeDtypeStruct((n_split, n_b, b_tile, 5), jnp.float32),
        grid=(n_split, n_b, steps_per_core),        # reduction (spatial) axis last
        in_specs=[
            pl.BlockSpec(
                (rows_tile, hw_tile),
                lambda c, i, k: (i, jnp.minimum(c * steps_per_core + k,
                                                last_block))),        # streamed image
            pl.BlockSpec((rows_tile, 5), lambda c, i, k: (0, 0)),     # resident weight
            pl.BlockSpec((b_tile, rows_tile), lambda c, i, k: (0, 0)),  # resident selector
        ],
        out_specs=pl.BlockSpec((None, None, b_tile, 5),
                               lambda c, i, k: (c, i, 0, 0)),
        scratch_shapes=[pltpu.VMEM((rows_tile, LANE), jnp.float32)],
        compiler_params=pltpu.CompilerParams(
            dimension_semantics=("parallel", "parallel", "arbitrary"),
            vmem_limit_bytes=vmem_limit),
    )(x, w_rows, e)

    out = (jnp.sum(partial, axis=0).reshape(B, 5)
           + jnp.reshape(b, (1, 5)).astype(jnp.float32))
    return out


def _reference(im, w, b):
    pooled = im.mean(axis=(2, 3))                    # (B, C)
    return pooled @ w + b                            # (B, 5)


if __name__ == "__main__":
    key = jax.random.PRNGKey(0)
    keys = jax.random.split(key, 8)

    def run_case(idx, B, C, H, W, **kw):
        im = jax.random.normal(keys[idx], (B, C, H, W), dtype=jnp.float32)
        # Deterministic head parameters (synthetic, not a checkpoint load).
        wt = jax.random.normal(keys[idx + 1], (C, 5), dtype=jnp.float32) * 0.1
        bs = jax.random.normal(keys[idx + 2], (1, 5), dtype=jnp.float32) * 0.1
        out = jax.block_until_ready(detector_forward(im, wt, bs, **kw))
        ref = _reference(im, wt, bs)
        assert out.shape == (B, 5)
        assert jnp.allclose(out, ref, atol=1e-4, rtol=1e-4)

    # Single-block fast path (HW exactly covered by one tile).
    run_case(0, 2, 4, 16, 16)
    # Multi-step spatial reduction + ragged-tail mask + 2-way TC split
    # (HW=400, 128-lane tiles -> 4 blocks, last block 16 valid lanes).
    run_case(1, 2, 4, 20, 20, max_hw_tile=128)
    # Odd step count -> clamped, fully-masked duplicate step on the split axis
    # (HW=324 -> 3 blocks across 2 cores).
    run_case(2, 2, 4, 18, 18, max_hw_tile=128)
    # B*C < 8 -> sublane fold path (3 rows packed to 24, HW 576 -> 72 lanes).
    run_case(3, 1, 3, 24, 24)

    print("KERNEL_OK")
</pallas_src>

<mosaic_0001>
module attributes {stable_mosaic.version = 11 : i64} {
  func.func @kernel(%arg0: i32, %arg1: i32, %arg2: i32, %arg3: memref<8x256xf32, #tpu.memory_space<vmem>>, %arg4: memref<8x5xf32, #tpu.memory_space<vmem>>, %arg5: memref<2x8xf32, #tpu.memory_space<vmem>>, %arg6: memref<1x1x2x5xf32, #tpu.memory_space<vmem>>, %arg7: memref<8x128xf32, #tpu.memory_space<vmem>>) attributes {dimension_semantics = [#tpu.dimension_semantics<parallel>, #tpu.dimension_semantics<parallel>, #tpu.dimension_semantics<arbitrary>], iteration_bounds = array<i64: 1, 1, 1>, scalar_prefetch = 0 : i64, scratch_operands = 1 : i64, tpu.core_type = #tpu.core_type<tc>, window_params = [{transform_indices = @transform_0, window_bounds = array<i64: 8, 256>}, {pipeline_mode = #tpu.pipeline_mode<synchronous>, transform_indices = @transform_1, window_bounds = array<i64: 8, 5>}, {pipeline_mode = #tpu.pipeline_mode<synchronous>, transform_indices = @transform_2, window_bounds = array<i64: 2, 8>}, {transform_indices = @transform_3, window_bounds = array<i64: 1, 1, 2, 5>}]} {
    %c0_i32 = arith.constant 0 : i32
    %0 = arith.cmpi eq, %arg2, %c0_i32 : i32
    %1 = arith.extui %0 : i1 to i32
    %c0_i32_0 = arith.constant 0 : i32
    %2 = arith.cmpi ne, %1, %c0_i32_0 : i32
    scf.if %2 {
      %cst = arith.constant 0.000000e+00 : f32
      %17 = vector.broadcast %cst : f32 to vector<8x128xf32>
      %c0 = arith.constant 0 : index
      %c0_9 = arith.constant 0 : index
      %18 = vector.load %arg7[%c0, %c0_9] : memref<8x128xf32, #tpu.memory_space<vmem>>, vector<8x128xf32>
      tpu.vector_store %arg7[%c0, %c0_9], %17 {strides = array<i32>} : memref<8x128xf32, #tpu.memory_space<vmem>>, vector<8x128xf32>,
    } else {
    }
    %c1_i32 = arith.constant 1 : i32
    %3 = arith.muli %arg0, %c1_i32 : i32
    %4 = arith.addi %3, %arg2 : i32
    %c256_i32 = arith.constant 256 : i32
    %5 = arith.muli %4, %c256_i32 : i32
    %c256_i32_1 = arith.constant 256 : i32
    %6 = arith.addi %5, %c256_i32_1 : i32
    %c256_i32_2 = arith.constant 256 : i32
    %7 = arith.cmpi sle, %6, %c256_i32_2 : i32
    %8 = arith.extui %7 : i1 to i32
    %c0_i32_3 = arith.constant 0 : i32
    %9 = arith.cmpi ne, %8, %c0_i32_3 : i32
    scf.if %9 {
      %cst = arith.constant 0.000000e+00 : f32
      %17 = vector.broadcast %cst : f32 to vector<8x128xf32>
      %c0_i32_9 = arith.constant 0 : i32
      %c128_i32 = arith.constant 128 : i32
      %18 = arith.muli %c0_i32_9, %c128_i32 : i32
      %19 = tpu.assume_multiple %18, 128 : i32
      %c0 = arith.constant 0 : index
      %20 = arith.index_cast %19 : i32 to index
      %21 = vector.load %arg3[%c0, %20] : memref<8x256xf32, #tpu.memory_space<vmem>>, vector<8x128xf32>
      %22 = arith.addf %17, %21 : vector<8x128xf32>
      %c1_i32_10 = arith.constant 1 : i32
      %c128_i32_11 = arith.constant 128 : i32
      %23 = arith.muli %c1_i32_10, %c128_i32_11 : i32
      %24 = tpu.assume_multiple %23, 128 : i32
      %c0_12 = arith.constant 0 : index
      %25 = arith.index_cast %24 : i32 to index
      %26 = vector.load %arg3[%c0_12, %25] : memref<8x256xf32, #tpu.memory_space<vmem>>, vector<8x128xf32>
      %27 = arith.addf %22, %26 : vector<8x128xf32>
      %c2_i32 = arith.constant 2 : i32
      %c0_13 = arith.constant 0 : index
      %c0_14 = arith.constant 0 : index
      %28 = vector.load %arg7[%c0_13, %c0_14] : memref<8x128xf32, #tpu.memory_space<vmem>>, vector<8x128xf32>
      %29 = arith.addf %28, %27 : vector<8x128xf32>
      %c0_15 = arith.constant 0 : index
      %c0_16 = arith.constant 0 : index
      %30 = vector.load %arg7[%c0_15, %c0_16] : memref<8x128xf32, #tpu.memory_space<vmem>>, vector<8x128xf32>
      tpu.vector_store %arg7[%c0_15, %c0_16], %29 {strides = array<i32>} : memref<8x128xf32, #tpu.memory_space<vmem>>, vector<8x128xf32>,
    } else {
    }
    %c256_i32_4 = arith.constant 256 : i32
    %10 = arith.addi %5, %c256_i32_4 : i32
    %c256_i32_5 = arith.constant 256 : i32
    %11 = arith.cmpi sgt, %10, %c256_i32_5 : i32
    %12 = arith.extui %11 : i1 to i32
    %c0_i32_6 = arith.constant 0 : i32
    %13 = arith.cmpi ne, %12, %c0_i32_6 : i32
    scf.if %13 {
      %17 = tpu.iota {dimensions = array<i32: 1>} : vector<8x128xi32>
      %cst = arith.constant 0.000000e+00 : f32
      %18 = vector.broadcast %cst : f32 to vector<8x128xf32>
      %c0_i32_9 = arith.constant 0 : i32
      %c128_i32 = arith.constant 128 : i32
      %19 = arith.muli %c0_i32_9, %c128_i32 : i32
      %20 = arith.addi %5, %19 : i32
      %21 = vector.broadcast %20 : i32 to vector<8x128xi32>
      %22 = arith.addi %21, %17 : vector<8x128xi32>
      %c256_i32_10 = arith.constant 256 : i32
      %23 = vector.broadcast %c256_i32_10 : i32 to vector<8x128xi32>
      %24 = arith.cmpi slt, %22, %23 : vector<8x128xi32>
      %c128_i32_11 = arith.constant 128 : i32
      %25 = arith.muli %c0_i32_9, %c128_i32_11 : i32
      %26 = tpu.assume_multiple %25, 128 : i32
      %c0 = arith.constant 0 : index
      %27 = arith.index_cast %26 : i32 to index
      %28 = vector.load %arg3[%c0, %27] : memref<8x256xf32, #tpu.memory_space<vmem>>, vector<8x128xf32>
      %cst_12 = arith.constant 0.000000e+00 : f32
      %29 = vector.broadcast %cst_12 : f32 to vector<8x128xf32>
      %30 = arith.select %24, %28, %29 : vector<8x128xi1>, vector<8x128xf32>
      %31 = arith.addf %18, %30 : vector<8x128xf32>
      %c1_i32_13 = arith.constant 1 : i32
      %c128_i32_14 = arith.constant 128 : i32
      %32 = arith.muli %c1_i32_13, %c128_i32_14 : i32
      %33 = arith.addi %5, %32 : i32
      %34 = vector.broadcast %33 : i32 to vector<8x128xi32>
      %35 = arith.addi %34, %17 : vector<8x128xi32>
      %c256_i32_15 = arith.constant 256 : i32
      %36 = vector.broadcast %c256_i32_15 : i32 to vector<8x128xi32>
      %37 = arith.cmpi slt, %35, %36 : vector<8x128xi32>
      %c128_i32_16 = arith.constant 128 : i32
      %38 = arith.muli %c1_i32_13, %c128_i32_16 : i32
      %39 = tpu.assume_multiple %38, 128 : i32
      %c0_17 = arith.constant 0 : index
      %40 = arith.index_cast %39 : i32 to index
      %41 = vector.load %arg3[%c0_17, %40] : memref<8x256xf32, #tpu.memory_space<vmem>>, vector<8x128xf32>
      %cst_18 = arith.constant 0.000000e+00 : f32
      %42 = vector.broadcast %cst_18 : f32 to vector<8x128xf32>
      %43 = arith.select %37, %41, %42 : vector<8x128xi1>, vector<8x128xf32>
      %44 = arith.addf %31, %43 : vector<8x128xf32>
      %c2_i32 = arith.constant 2 : i32
      %c0_19 = arith.constant 0 : index
      %c0_20 = arith.constant 0 : index
      %45 = vector.load %arg7[%c0_19, %c0_20] : memref<8x128xf32, #tpu.memory_space<vmem>>, vector<8x128xf32>
      %46 = arith.addf %45, %44 : vector<8x128xf32>
      %c0_21 = arith.constant 0 : index
      %c0_22 = arith.constant 0 : index
      %47 = vector.load %arg7[%c0_21, %c0_22] : memref<8x128xf32, #tpu.memory_space<vmem>>, vector<8x128xf32>
      tpu.vector_store %arg7[%c0_21, %c0_22], %46 {strides = array<i32>} : memref<8x128xf32, #tpu.memory_space<vmem>>, vector<8x128xf32>,
    } else {
    }
    %c0_i32_7 = arith.constant 0 : i32
    %14 = arith.cmpi eq, %arg2, %c0_i32_7 : i32
    %15 = arith.extui %14 : i1 to i32
    %c0_i32_8 = arith.constant 0 : i32
    %16 = arith.cmpi ne, %15, %c0_i32_8 : i32
    scf.if %16 {
      %c0 = arith.constant 0 : index
      %c0_9 = arith.constant 0 : index
      %17 = vector.load %arg7[%c0, %c0_9] : memref<8x128xf32, #tpu.memory_space<vmem>>, vector<8x128xf32>
      %cst = arith.constant dense<0.000000e+00> : vector<8xf32>
      %18 = vector.multi_reduction <add>, %17, %cst [1] : vector<8x128xf32> to vector<8xf32>
      %19 = vector.shape_cast %18 : vector<8xf32> to vector<8x1xf32>
      %c0_10 = arith.constant 0 : index
      %c0_11 = arith.constant 0 : index
      %20 = vector.load %arg4[%c0_10, %c0_11] : memref<8x5xf32, #tpu.memory_space<vmem>>, vector<8x5xf32>
      %21 = vector.broadcast %19 : vector<8x1xf32> to vector<8x5xf32>
      %22 = arith.mulf %21, %20 : vector<8x5xf32>
      %c0_12 = arith.constant 0 : index
      %c0_13 = arith.constant 0 : index
      %23 = vector.load %arg5[%c0_12, %c0_13] : memref<2x8xf32, #tpu.memory_space<vmem>>, vector<2x8xf32>
      %cst_14 = arith.constant dense<0.000000e+00> : vector<2x5xf32>
      %24 = tpu.matmul %23, %22, %cst_14 {dimension_numbers = #tpu.dot_dimension_numbers<[1], [0], [0], [1], [0, 0, 1, 1], [], []>} : vector<2x8xf32>, vector<8x5xf32>, vector<2x5xf32> -> vector<2x5xf32>
      %c0_15 = arith.constant 0 : index
      %c0_16 = arith.constant 0 : index
      %c0_17 = arith.constant 0 : index
      %c0_18 = arith.constant 0 : index
      %25 = vector.load %arg6[%c0_15, %c0_16, %c0_17, %c0_18] : memref<1x1x2x5xf32, #tpu.memory_space<vmem>>, vector<1x1x2x5xf32>
      %26 = vector.shape_cast %25 : vector<1x1x2x5xf32> to vector<2x5xf32>
      %27 = vector.shape_cast %24 : vector<2x5xf32> to vector<1x1x2x5xf32>
      tpu.vector_store %arg6[%c0_15, %c0_16, %c0_17, %c0_18], %27 {strides = array<i32>} : memref<1x1x2x5xf32, #tpu.memory_space<vmem>>, vector<1x1x2x5xf32>,
    } else {
    }
    return
  }
  func.func @transform_0(%arg0: i32, %arg1: i32, %arg2: i32) -> (i32, i32) {
    %c1_i32 = arith.constant 1 : i32
    %0 = arith.muli %arg0, %c1_i32 : i32
    %1 = arith.addi %0, %arg2 : i32
    %c0_i32 = arith.constant 0 : i32
    %2 = arith.minsi %1, %c0_i32 : i32
    %c0_i32_0 = arith.constant 0 : i32
    return %arg1, %2 : i32, i32
  }
  func.func @transform_1(%arg0: i32, %arg1: i32, %arg2: i32) -> (i32, i32) {
    %c0_i32 = arith.constant 0 : i32
    %c0_i32_0 = arith.constant 0 : i32
    %c0_i32_1 = arith.constant 0 : i32
    return %c0_i32, %c0_i32_0 : i32, i32
  }
  func.func @transform_2(%arg0: i32, %arg1: i32, %arg2: i32) -> (i32, i32) {
    %c0_i32 = arith.constant 0 : i32
    %c0_i32_0 = arith.constant 0 : i32
    %c0_i32_1 = arith.constant 0 : i32
    return %c0_i32, %c0_i32_0 : i32, i32
  }
  func.func @transform_3(%arg0: i32, %arg1: i32, %arg2: i32) -> (i32, i32, i32, i32) {
    %c0_i32 = arith.constant 0 : i32
    %c0_i32_0 = arith.constant 0 : i32
    %c0_i32_1 = arith.constant 0 : i32
    return %arg0, %arg1, %c0_i32, %c0_i32_0 : i32, i32, i32, i32
  }
}

</mosaic_0001>

<llo_original>
// kernel: tpu_custom_call.1
$region0: #{tpu_custom_call.1}
  #allocation0 [shape = 'u32[]', space=smem, size = 0x4, offset = 0x4, fixed_abs, tag = 'smem constant byte address 0x4 - core index']
  #allocation1 [shape = 'u32[144,128]{1,0:T(1,128)}', space=vmem, size = 0x12000, scoped, tag = 'internal scratch']
  #allocation2 [shape = 'f32[8,128]{1,0:T(8,128)}', space=vmem, size = 0x1000, scoped, tag = 'scratch operand']
  %s0 = inlined_call_operand.hbm [shape: f32[8,256], index: 0, kind: input, shape index: {}]
  %s1 = inlined_call_operand.hbm [shape: f32[8,5], index: 1, kind: input, shape index: {}]
  %s2 = inlined_call_operand.vmem [shape: f32[2,8], index: 2, kind: input, shape index: {}]
  %s3 = inlined_call_operand.hbm [shape: f32[1,1,2,5], index: 3, kind: output, shape index: {}]
  %s4 = sld [smem:[#allocation0]]
  $region46: #{tpu_custom_call.1} parent=0
    _
  %s6 = ssub.s32 1, %s4
  %s7 = scalar_select 0, %s6, %s4
  $region1: #{tpu_custom_call.1} parent=0
    #allocation3 [shape = 'u8[8192]{0}', space=vmem, size = 0x2000, scoped, tag = 'input window, operand 0, single buffered']
    #allocation4 [shape = 's32[1]{0}', space=sflag, size = 0x4, scoped, tag = 'scoped memory for tpu_custom_call.1']
    #allocation5 [shape = 's32[1]{0}', space=sflag, size = 0x4, scoped, tag = 'scoped memory for tpu_custom_call.1']
    #allocation6 [shape = 'u8[4096]{0}', space=vmem, size = 0x1000, scoped, tag = 'input window, operand 1, single buffered']
    #allocation7 [shape = 's32[1]{0}', space=sflag, size = 0x4, scoped, tag = 'scoped memory for tpu_custom_call.1']
    #allocation8 [shape = 'u8[1024]{0}', space=vmem, size = 0x400, scoped, tag = 'output window, operand 0, single buffered']
    %8 = vsyncpa [#allocation4], 0
    %9 = vsyncpa [#allocation7], 0
    %10 = vsyncpa [#allocation5], 0
    // Predicated region
    $region2: #{tpu_custom_call.1} parent=1 // pred_check
      _
    $region3: #{tpu_custom_call.1} parent=1 // pred_check_branch
      %12 = sbr.rel (0) target = $region5
    $region4: #{tpu_custom_call.1} parent=1 // pred_region
      %s13 = sadd.s32 0, 0
      %p14 = scmp.lt.s32.totalorder %s13, 0
      %s15 = scalar_select %p14, %s13, 0
      %s16 = smul.u32 2, %s15
      %s18 = ssub.s32 256, 256
      %19 = vsyncadd [#allocation4], %s18
      %s20 = smul.addr %s16, 128
      %s21 = scalar_lea.hbm %s0, %s20
      %s23 = sshll.u32 [#allocation3], 4
      %s24 = int_to_ptr.vmem [resolvable:$true] %s23
      %26 = dma.hbm_to_vmem [thread:$0]  %s21, 256, %s24, [#allocation4]
    $region5: #{tpu_custom_call.1} parent=1 // pred_fallthru
      _
    // Predicated region
    $region6: #{tpu_custom_call.1} parent=1 // pred_check
      _
    $region7: #{tpu_custom_call.1} parent=1 // pred_check_branch
      %28 = sbr.rel (0) target = $region9
    $region8: #{tpu_custom_call.1} parent=1 // pred_region
      %s30 = ssub.s32 128, 128
      %31 = vsyncadd [#allocation7], %s30
      %s33 = sshll.u32 [#allocation6], 4
      %s34 = int_to_ptr.vmem [resolvable:$true] %s33
      %36 = dma.hbm_to_vmem [thread:$0]  %s1, 128, %s34, [#allocation7]
    $region9: #{tpu_custom_call.1} parent=1 // pred_fallthru
      _
    // Predicated region
    $region10: #{tpu_custom_call.1} parent=1 // pred_check
      _
    $region11: #{tpu_custom_call.1} parent=1 // pred_check_branch
      %38 = sbr.rel (0) target = $region13
    $region12: #{tpu_custom_call.1} parent=1 // pred_region
      _
    $region13: #{tpu_custom_call.1} parent=1 // pred_fallthru
      _
    // Predicated region
    $region14: #{tpu_custom_call.1} parent=1 // pred_check
      _
    $region15: #{tpu_custom_call.1} parent=1 // pred_check_branch
      %40 = sbr.rel (0) target = $region17
    $region16: #{tpu_custom_call.1} parent=1 // pred_region
      %41 = dma.done [#allocation4], 256
    $region17: #{tpu_custom_call.1} parent=1 // pred_fallthru
      _
    // Predicated region
    $region18: #{tpu_custom_call.1} parent=1 // pred_check
      _
    $region19: #{tpu_custom_call.1} parent=1 // pred_check_branch
      %43 = sbr.rel (0) target = $region21
    $region20: #{tpu_custom_call.1} parent=1 // pred_region
      %44 = dma.done [#allocation7], 128
    $region21: #{tpu_custom_call.1} parent=1 // pred_fallthru
      _
    %s45 = sadd.s32 0, 0
    %p46 = scmp.lt.s32.totalorder %s45, 0
    %s47 = scalar_select %p46, %s45, 0
    %s48 = smul.u32 2, %s47
    %p49 = scmp.eq.s32.totalorder 0, 0
    // Predicated region
    $region22: #{tpu_custom_call.1} parent=1 // pred_check
      %p50 = pneg %p49
    $region23: #{tpu_custom_call.1} parent=1 // pred_check_branch
      %52 = sbr.rel (%p50) target = $region25
    $region24: #{tpu_custom_call.1} parent=1 // pred_region
      %53 = vst [vmem:[#allocation2] sm:$0xff] 0.0
    $region25: #{tpu_custom_call.1} parent=1 // pred_fallthru
      _
    %s54 = sadd.s32 0, 0
    %s55 = smul.u32 %s54, 256
    %s56 = sadd.s32 %s55, 256
    %p57 = scmp.le.s32.totalorder %s56, 256
    // Predicated region
    $region26: #{tpu_custom_call.1} parent=1 // pred_check
      %p58 = pneg %p57
    $region27: #{tpu_custom_call.1} parent=1 // pred_check_branch
      %60 = sbr.rel (%p58) target = $region29
    $region28: #{tpu_custom_call.1} parent=1 // pred_region
      %v61 = vld [vmem:[#allocation3] sm:$0xff]
      %v62 = vadd.f32 %v61, 0.0
      %s63 = scalar_lea.vmem [#allocation3], 8
      %v64 = vld [vmem:[%s63] sm:$0xff]
      %v65 = vadd.f32 %v62, %v64
      %v66 = vld [vmem:[#allocation2] sm:$0xff]
      %v67 = vadd.f32 %v66, %v65
      %68 = vst [vmem:[#allocation2] sm:$0xff] %v67
    $region29: #{tpu_custom_call.1} parent=1 // pred_fallthru
      _
    %p69 = scmp.gt.s32.totalorder %s56, 256
    // Predicated region
    $region30: #{tpu_custom_call.1} parent=1 // pred_check
      %p70 = pneg %p69
    $region31: #{tpu_custom_call.1} parent=1 // pred_check_branch
      %72 = sbr.rel (%p70) target = $region33
    $region32: #{tpu_custom_call.1} parent=1 // pred_region
      %v73 = vlaneseq
      %v74 = vand.u32 %v73, 127
      %v75 = vstv %s55
      %v76 = vadd.s32 %v75, %v74
      %vm77 = vcmp.lt.s32.totalorder %v76, 256
      %v78 = vld [vmem:[#allocation3] sm:$0xff]
      %v79 = vsel %vm77, %v78, 0.0
      %v80 = vadd.f32 %v79, 0.0
      %s81 = sadd.s32 %s55, 128
      %v82 = vstv %s81
      %v83 = vadd.s32 %v82, %v74
      %vm84 = vcmp.lt.s32.totalorder %v83, 256
      %s85 = scalar_lea.vmem [#allocation3], 8
      %v86 = vld [vmem:[%s85] sm:$0xff]
      %v87 = vsel %vm84, %v86, 0.0
      %v88 = vadd.f32 %v80, %v87
      %v89 = vld [vmem:[#allocation2] sm:$0xff]
      %v90 = vadd.f32 %v89, %v88
      %91 = vst [vmem:[#allocation2] sm:$0xff] %v90
    $region33: #{tpu_custom_call.1} parent=1 // pred_fallthru
      _
    // Predicated region
    $region34: #{tpu_custom_call.1} parent=1 // pred_check
      %p92 = pneg %p49
    $region35: #{tpu_custom_call.1} parent=1 // pred_check_branch
      %94 = sbr.rel (%p92) target = $region37
    $region36: #{tpu_custom_call.1} parent=1 // pred_region
      %v95 = vld [vmem:[#allocation2] sm:$0xff]
      %96 = vadd.xlane.f32.xlu0 %v95
      %v97 = vpop.xlane.xlu0 %96
      %v98 = vld [vmem:[#allocation6] sm:$0xff]
      %v99 = vmul.f32 %v97, %v98
      %v100 = vld [vmem:[%s2] sm:$0x3]
      %vm101 = vcmask 64512
      %v103 = vsel %vm101, %v100, 0
      %105 = vmatprep.subr.mxu0 0.0
      %106 = vmatpush1.msra.mxu0 %v99
      %107 = vmatprep.subr.mxu0 0.0
      %108 = vmatpush1.msra.mxu0 0.0
      %109 = vmatprep.subr.mxu0 0.0
      %110 = vmatpush1.msra.mxu0 0.0
      %111 = vmatprep.subr.mxu0 0.0
      %112 = vmatpush1.msra.mxu0 0.0
      %113 = vmatprep.subr.mxu0 0.0
      %114 = vmatpush1.msra.mxu0 0.0
      %115 = vmatprep.subr.mxu0 0.0
      %116 = vmatpush1.msra.mxu0 0.0
      %117 = vmatprep.subr.mxu0 0.0
      %118 = vmatpush1.msra.mxu0 0.0
      %119 = vmatprep.subr.mxu0 0.0
      %120 = vmatpush1.msra.mxu0 0.0
      %121 = vmatprep.subr.mxu0 0.0
      %122 = vmatpush1.msra.mxu0 0.0
      %123 = vmatprep.subr.mxu0 0.0
      %124 = vmatpush1.msra.mxu0 0.0
      %125 = vmatprep.subr.mxu0 0.0
      %126 = vmatpush1.msra.mxu0 0.0
      %127 = vmatprep.subr.mxu0 0.0
      %128 = vmatpush1.msra.mxu0 0.0
      %129 = vmatprep.subr.mxu0 0.0
      %130 = vmatpush1.msra.mxu0 0.0
      %131 = vmatprep.subr.mxu0 0.0
      %132 = vmatpush1.msra.mxu0 0.0
      %133 = vmatprep.subr.mxu0 0.0
      %134 = vmatpush1.msra.mxu0 0.0
      %135 = vmatprep.subr.mxu0 0.0
      %136 = vmatpush1.msra.mxu0 0.0
      %137 = vmatprep.subr.mxu0 0.0
      %138 = vmatpush1.msra.mxu0 0.0
      %139 = vmatprep.subr.mxu0 0.0
      %140 = vmatpush1.msra.mxu0 0.0
      %141 = vmatprep.subr.mxu0 0.0
      %142 = vmatpush1.msra.mxu0 0.0
      %143 = vmatprep.subr.mxu0 0.0
      %144 = vmatpush1.msra.mxu0 0.0
      %145 = vmatprep.subr.mxu0 0.0
      %146 = vmatpush1.msra.mxu0 0.0
      %147 = vmatprep.subr.mxu0 0.0
      %148 = vmatpush1.msra.mxu0 0.0
      %149 = vmatprep.subr.mxu0 0.0
      %150 = vmatpush1.msra.mxu0 0.0
      %151 = vmatprep.subr.mxu0 0.0
      %152 = vmatpush1.msra.mxu0 0.0
      %153 = vmatprep.subr.mxu0 0.0
      %154 = vmatpush1.msra.mxu0 0.0
      %155 = vmatprep.subr.mxu0 0.0
      %156 = vmatpush1.msra.mxu0 0.0
      %157 = vmatprep.subr.mxu0 0.0
      %158 = vmatpush1.msra.mxu0 0.0
      %159 = vmatprep.subr.mxu0 0.0
      %160 = vmatpush1.msra.mxu0 0.0
      %161 = vmatprep.subr.mxu0 0.0
      %162 = vmatpush1.msra.mxu0 0.0
      %163 = vmatprep.subr.mxu0 0.0
      %164 = vmatpush1.msra.mxu0 0.0
      %165 = vmatprep.subr.mxu0 0.0
      %166 = vmatpush1.msra.mxu0 0.0
      %167 = vmatprep.subr.mxu0 0.0
      %168 = vmatpush1.msra.mxu0 0.0
      %169 = vmatprep.mubr.f32.mxu0 0.0
      %170 = vmatmul.mubr.f32.gmra.mrb[0].mxu0 %v103
      %v171 = vpop.f32.mrb[0].mxu0
      %v172 = vadd.f32 0.0, %v171
      %v173 = vpop.f32.mrb[0].mxu0
      %174 = vdwg.mxu0
      %vm175 = vcmask 33792
      %176 = vst.msk [vmem:[#allocation8] sm:$0x3] %vm175, %v172
    $region37: #{tpu_custom_call.1} parent=1 // pred_fallthru
      _
    // Predicated region
    $region38: #{tpu_custom_call.1} parent=1 // pred_check
      _
    $region39: #{tpu_custom_call.1} parent=1 // pred_check_branch
      %178 = sbr.rel (0) target = $region41
    $region40: #{tpu_custom_call.1} parent=1 // pred_region
      %s180 = ssub.s32 32, 32
      %181 = vsyncadd [#allocation5], %s180
      %s183 = sshll.u32 [#allocation8], 4
      %s184 = int_to_ptr.vmem [resolvable:$true] %s183
      %186 = dma.vmem_to_hbm [thread:$0]  %s184, 32, %s3, [#allocation5]
    $region41: #{tpu_custom_call.1} parent=1 // pred_fallthru
      _
    // Predicated region
    $region42: #{tpu_custom_call.1} parent=1 // pred_check
      _
    $region43: #{tpu_custom_call.1} parent=1 // pred_check_branch
      %188 = sbr.rel (0) target = $region45
    $region44: #{tpu_custom_call.1} parent=1 // pred_region
      %189 = dma.done [#allocation5], 32
    $region45: #{tpu_custom_call.1} parent=1 // pred_fallthru
      _
    %190 = vsyncpa [#allocation4], 1
    %191 = vsyncpa [#allocation7], 1
    %192 = vsyncpa [#allocation5], 1

</llo_original>
